<compile_context>
chip_gen: v7x
topology: tpu7x:2x2x1
jax: 0.10.0
libtpu: 0.0.40
codegen_flags: <defaults>
</compile_context>

<pallas_src>
import functools

import numpy as np

import jax
import jax.numpy as jnp
from jax.experimental import pallas as pl
from jax.experimental.pallas import tpu as pltpu


def _vae_kernel(input_dim, latent_dim, bias_offsets, matmul_dtype,
                x_ref, eps_ref,
                w_e1_ref, w_e2_ref, w_hd_ref, w_d1_ref, w_d2_ref, w_out_ref,
                b_ref, out_ref):
    """One batch tile of the full VAE forward pass, in (feature, TB) layout."""
    o_e1, o_e2, o_hd, o_d1, o_d2, o_out = bias_offsets

    def dense(w_ref, a, b_off):
        # (out, in) @ (in, TB) on the MXU with f32 accumulation; bias add (a
        # lane-broadcast of the (out, 1) bias slice) and activations stay f32.
        n = w_ref.shape[0]
        acc = jnp.dot(w_ref[...], a.astype(matmul_dtype),
                      preferred_element_type=jnp.float32)
        return acc + b_ref[b_off:b_off + n, :]

    relu = lambda v: jnp.maximum(v, 0.0)

    x = x_ref[...]                                   # (input_dim, TB) bf16

    # ----- Encoder: (Linear -> ReLU -> Dropout[identity]) x 2 -----
    h = relu(dense(w_e1_ref, x, o_e1))               # (h1, TB)
    h = relu(dense(w_e2_ref, h, o_e2))               # (h2, TB)

    # ----- Fused latent heads: one matmul producing [mu ; logvar] -----
    heads = dense(w_hd_ref, h, o_hd)                 # (2*latent, TB)
    mu = heads[:latent_dim, :]                       # sublane slice (free at 8-mult)
    logvar = heads[latent_dim:, :]

    # ----- Reparameterization: z = mu + eps * exp(0.5 * logvar) -----
    z = mu + eps_ref[...] * jnp.exp(0.5 * logvar)    # (latent, TB) f32

    # ----- Decoder: (Linear -> ReLU -> Dropout[identity]) x 2 -> Linear -----
    d = relu(dense(w_d1_ref, z, o_d1))               # (h2, TB)
    d = relu(dense(w_d2_ref, d, o_d2))               # (h1, TB)
    recon = dense(w_out_ref, d, o_out)               # (input_dim, TB)

    # Single lane-dense output slab: [recon ; mu ; logvar] along the sublane axis.
    out_ref[:input_dim, :] = recon.astype(out_ref.dtype)
    out_ref[input_dim:, :] = heads.astype(out_ref.dtype)


def _pick_batch_tile(batch, block_batch):
    """Lane-friendly batch tile that never requires a wrapper-side pad copy."""
    if batch % 128 != 0 or batch <= 128:
        # Small or ragged batch: one tile spanning the whole batch (a block dim
        # equal to the full array dim is always legal).  No pad copy needed.
        # TODO(synk): a very large ragged batch would want a tiled main call plus
        # a small remainder call instead of one giant tile.
        return batch
    cap = max(128, min(block_batch, batch))
    if batch >= 256:
        cap = min(cap, batch // 2)       # keep >=2 grid steps for v7x megacore
    cap = max(128, cap)
    tb = (cap // 128) * 128
    while tb > 128 and batch % tb != 0:
        tb -= 128
    return tb


def vae_forward(x, eps, params, *, block_batch=4096, matmul_dtype=jnp.bfloat16,
                out_dtype=jnp.float32):
    """Fused VAE forward as one batch-tiled Pallas kernel (transposed layout).

    Args:
      x:   (batch, input_dim) float array.
      eps: (batch, latent_dim) standard-normal noise.
      params: dict of weights/biases; weights stored (out, in) (PyTorch layout),
        biases stored (out,).
    Returns:
      (recon_x, mu, logvar), each (batch, feature) float32.
    """
    batch, input_dim = x.shape
    latent_dim = eps.shape[1]

    # Fuse the mu/logvar heads into one (2*latent, h2) weight -> one matmul.
    w_hd = jnp.concatenate([params["w_mu"], params["w_lv"]], axis=0)
    b_hd = jnp.concatenate([params["b_mu"], params["b_lv"]], axis=0)

    weights = [params["w_e1"], params["w_e2"], w_hd,
               params["w_d1"], params["w_d2"], params["w_out"]]
    weights = [w.astype(matmul_dtype) for w in weights]

    # Pack all biases into a single pinned (total, 1) f32 slab.
    biases = [params["b_e1"], params["b_e2"], b_hd,
              params["b_d1"], params["b_d2"], params["b_out"]]
    offsets, off = [], 0
    for b in biases:
        offsets.append(off)
        off += int(b.shape[0])
    bias_slab = jnp.concatenate(biases).astype(jnp.float32).reshape(-1, 1)

    # Transposed activations: batch on the 128-lane (last) axis.
    xt = jnp.asarray(x).T.astype(matmul_dtype)         # (input_dim, batch) bf16
    epst = jnp.asarray(eps).T.astype(jnp.float32)      # (latent, batch)    f32

    tb = _pick_batch_tile(batch, block_batch)
    grid = (batch // tb,)
    d_out = input_dim + 2 * latent_dim

    def stream_spec(feat):
        return pl.BlockSpec((feat, tb), lambda i: (0, i))

    def pinned_spec(a):
        return pl.BlockSpec(a.shape, lambda i: (0, 0))

    in_specs = [stream_spec(input_dim), stream_spec(latent_dim)]
    in_specs += [pinned_spec(w) for w in weights]
    in_specs += [pinned_spec(bias_slab)]

    out_specs = stream_spec(d_out)
    out_shape = jax.ShapeDtypeStruct((d_out, batch), out_dtype)

    # Advisory cost estimate so XLA schedules sensibly around the custom call.
    flops = 2 * batch * sum(int(w.shape[0]) * int(w.shape[1]) for w in weights)
    bytes_accessed = int(
        xt.size * np.dtype(matmul_dtype).itemsize
        + epst.size * 4
        + d_out * batch * np.dtype(out_dtype).itemsize
        + sum(w.size * np.dtype(matmul_dtype).itemsize for w in weights)
        + bias_slab.size * 4)
    cost = pl.CostEstimate(flops=flops,
                           transcendentals=batch * latent_dim,
                           bytes_accessed=bytes_accessed)

    kernel = functools.partial(_vae_kernel, input_dim, latent_dim,
                               tuple(offsets), matmul_dtype)

    out = pl.pallas_call(
        kernel,
        grid=grid,
        in_specs=in_specs,
        out_specs=out_specs,
        out_shape=out_shape,
        compiler_params=pltpu.CompilerParams(
            dimension_semantics=("parallel",),   # batch tiles across TCs on v7x
        ),
        cost_estimate=cost,
    )(xt, epst, *weights, bias_slab)

    recon = out[:input_dim, :].T.astype(jnp.float32)
    mu = out[input_dim:input_dim + latent_dim, :].T.astype(jnp.float32)
    logvar = out[input_dim + latent_dim:, :].T.astype(jnp.float32)
    return recon, mu, logvar


def init_params(key, input_dim, hidden_dims, latent_dim):
    """Deterministic PyTorch-style init: weights (out, in), biases (out,)."""
    assert len(hidden_dims) == 2, "this script instantiates 2 encoder hidden layers"
    h1, h2 = hidden_dims

    def linear(key, fan_in, fan_out):
        kw, kb = jax.random.split(key)
        scale = 1.0 / jnp.sqrt(fan_in)
        w = jax.random.uniform(kw, (fan_out, fan_in), jnp.float32, -scale, scale)
        b = jax.random.uniform(kb, (fan_out,), jnp.float32, -scale, scale)
        return w, b

    keys = jax.random.split(key, 7)
    p = {}
    # encoder: input_dim -> h1 -> h2
    p["w_e1"], p["b_e1"] = linear(keys[0], input_dim, h1)
    p["w_e2"], p["b_e2"] = linear(keys[1], h1, h2)
    # latent heads: h2 -> latent
    p["w_mu"], p["b_mu"] = linear(keys[2], h2, latent_dim)
    p["w_lv"], p["b_lv"] = linear(keys[3], h2, latent_dim)
    # decoder: latent -> h2 -> h1 -> input_dim
    p["w_d1"], p["b_d1"] = linear(keys[4], latent_dim, h2)
    p["w_d2"], p["b_d2"] = linear(keys[5], h2, h1)
    p["w_out"], p["b_out"] = linear(keys[6], h1, input_dim)
    return p


def vae_reference(x, eps, params, matmul_dtype=jnp.float32):
    """Pure-JAX reference with the same matmul dtype/accumulation as the kernel."""
    def dense(a, w, b):
        return (jnp.dot(a.astype(matmul_dtype), w.astype(matmul_dtype).T,
                        preferred_element_type=jnp.float32) + b[None, :])

    relu = lambda v: jnp.maximum(v, 0.0)
    h = relu(dense(x, params["w_e1"], params["b_e1"]))
    h = relu(dense(h, params["w_e2"], params["b_e2"]))
    mu = dense(h, params["w_mu"], params["b_mu"])
    logvar = dense(h, params["w_lv"], params["b_lv"])
    z = mu + eps * jnp.exp(0.5 * logvar)
    d = relu(dense(z, params["w_d1"], params["b_d1"]))
    d = relu(dense(d, params["w_d2"], params["b_d2"]))
    recon = dense(d, params["w_out"], params["b_out"])
    return recon, mu, logvar


def _check(got, ref, atol, rtol):
    assert jnp.allclose(got, ref, atol=atol, rtol=rtol), \
        float(jnp.max(jnp.abs(got - ref)))


if __name__ == "__main__":
    # Small, module-consistent shapes: flat feature vectors (intrusion records).
    batch = 8
    input_dim = 16
    hidden_dims = [32, 16]
    latent_dim = 8

    key = jax.random.PRNGKey(0)
    k_params, k_x, k_eps, k_x2, k_eps2 = jax.random.split(key, 5)

    params = init_params(k_params, input_dim, hidden_dims, latent_dim)
    x = jax.random.normal(k_x, (batch, input_dim), jnp.float32)
    eps = jax.random.normal(k_eps, (batch, latent_dim), jnp.float32)

    recon, mu, logvar = vae_forward(x, eps, params)
    jax.block_until_ready((recon, mu, logvar))

    assert recon.shape == (batch, input_dim)
    assert mu.shape == (batch, latent_dim)
    assert logvar.shape == (batch, latent_dim)

    # Correctness vs a pure-JAX reference using the SAME bf16-matmul numerics.
    r_ref, mu_ref, lv_ref = vae_reference(x, eps, params, matmul_dtype=jnp.bfloat16)
    _check(mu, mu_ref, 2e-3, 2e-3)
    _check(logvar, lv_ref, 2e-3, 2e-3)
    _check(recon, r_ref, 2e-3, 2e-3)

    # Loose sanity check vs the full-f32 reference (bf16 matmul rounding only).
    r32, mu32, lv32 = vae_reference(x, eps, params, matmul_dtype=jnp.float32)
    _check(recon, r32, 5e-2, 5e-2)
    _check(mu, mu32, 5e-2, 5e-2)
    _check(logvar, lv32, 5e-2, 5e-2)

    # Also exercise the lane-aligned multi-tile path (128-multiple batch, grid=2).
    batch2 = 512
    x2 = jax.random.normal(k_x2, (batch2, input_dim), jnp.float32)
    eps2 = jax.random.normal(k_eps2, (batch2, latent_dim), jnp.float32)
    r2, mu2, lv2 = vae_forward(x2, eps2, params, block_batch=256)
    jax.block_until_ready((r2, mu2, lv2))
    r2_ref, mu2_ref, lv2_ref = vae_reference(x2, eps2, params,
                                             matmul_dtype=jnp.bfloat16)
    _check(mu2, mu2_ref, 2e-3, 2e-3)
    _check(lv2, lv2_ref, 2e-3, 2e-3)
    _check(r2, r2_ref, 2e-3, 2e-3)

    print("KERNEL_OK")
</pallas_src>

<mosaic_0001>
module attributes {stable_mosaic.version = 11 : i64} {
  func.func @_vae_kernel(%arg0: i32, %arg1: memref<16x8xbf16, #tpu.memory_space<vmem>>, %arg2: memref<8x8xf32, #tpu.memory_space<vmem>>, %arg3: memref<32x16xbf16, #tpu.memory_space<vmem>>, %arg4: memref<16x32xbf16, #tpu.memory_space<vmem>>, %arg5: memref<16x16xbf16, #tpu.memory_space<vmem>>, %arg6: memref<16x8xbf16, #tpu.memory_space<vmem>>, %arg7: memref<32x16xbf16, #tpu.memory_space<vmem>>, %arg8: memref<16x32xbf16, #tpu.memory_space<vmem>>, %arg9: memref<128x1xf32, #tpu.memory_space<vmem>>, %arg10: memref<32x8xf32, #tpu.memory_space<vmem>>) attributes {dimension_semantics = [#tpu.dimension_semantics<parallel>], iteration_bounds = array<i64: 1>, scalar_prefetch = 0 : i64, scratch_operands = 0 : i64, tpu.core_type = #tpu.core_type<tc>, window_params = [{transform_indices = @transform_0, window_bounds = array<i64: 16, 8>}, {transform_indices = @transform_1, window_bounds = array<i64: 8, 8>}, {pipeline_mode = #tpu.pipeline_mode<synchronous>, transform_indices = @transform_2, window_bounds = array<i64: 32, 16>}, {pipeline_mode = #tpu.pipeline_mode<synchronous>, transform_indices = @transform_3, window_bounds = array<i64: 16, 32>}, {pipeline_mode = #tpu.pipeline_mode<synchronous>, transform_indices = @transform_4, window_bounds = array<i64: 16, 16>}, {pipeline_mode = #tpu.pipeline_mode<synchronous>, transform_indices = @transform_5, window_bounds = array<i64: 16, 8>}, {pipeline_mode = #tpu.pipeline_mode<synchronous>, transform_indices = @transform_6, window_bounds = array<i64: 32, 16>}, {pipeline_mode = #tpu.pipeline_mode<synchronous>, transform_indices = @transform_7, window_bounds = array<i64: 16, 32>}, {pipeline_mode = #tpu.pipeline_mode<synchronous>, transform_indices = @transform_8, window_bounds = array<i64: 128, 1>}, {transform_indices = @transform_9, window_bounds = array<i64: 32, 8>}]} {
    %c0 = arith.constant 0 : index
    %c0_0 = arith.constant 0 : index
    %0 = vector.load %arg1[%c0, %c0_0] : memref<16x8xbf16, #tpu.memory_space<vmem>>, vector<16x8xbf16>
    %c0_1 = arith.constant 0 : index
    %c0_2 = arith.constant 0 : index
    %1 = vector.load %arg3[%c0_1, %c0_2] : memref<32x16xbf16, #tpu.memory_space<vmem>>, vector<32x16xbf16>
    %cst = arith.constant dense<0.000000e+00> : vector<32x8xf32>
    %2 = tpu.matmul %1, %0, %cst {dimension_numbers = #tpu.dot_dimension_numbers<[1], [0], [0], [1], [0, 0, 1, 1], [], []>} : vector<32x16xbf16>, vector<16x8xbf16>, vector<32x8xf32> -> vector<32x8xf32>
    %c0_3 = arith.constant 0 : index
    %c0_4 = arith.constant 0 : index
    %3 = vector.load %arg9[%c0_3, %c0_4] : memref<128x1xf32, #tpu.memory_space<vmem>>, vector<32x1xf32>
    %4 = vector.broadcast %3 : vector<32x1xf32> to vector<32x8xf32>
    %5 = arith.addf %2, %4 : vector<32x8xf32>
    %cst_5 = arith.constant 0.000000e+00 : f32
    %6 = vector.broadcast %cst_5 : f32 to vector<32x8xf32>
    %7 = arith.maximumf %5, %6 : vector<32x8xf32>
    %c0_6 = arith.constant 0 : index
    %c0_7 = arith.constant 0 : index
    %8 = vector.load %arg4[%c0_6, %c0_7] : memref<16x32xbf16, #tpu.memory_space<vmem>>, vector<16x32xbf16>
    %9 = arith.truncf %7 : vector<32x8xf32> to vector<32x8xbf16>
    %cst_8 = arith.constant dense<0.000000e+00> : vector<16x8xf32>
    %10 = tpu.matmul %8, %9, %cst_8 {dimension_numbers = #tpu.dot_dimension_numbers<[1], [0], [0], [1], [0, 0, 1, 1], [], []>} : vector<16x32xbf16>, vector<32x8xbf16>, vector<16x8xf32> -> vector<16x8xf32>
    %c32 = arith.constant 32 : index
    %c0_9 = arith.constant 0 : index
    %11 = vector.load %arg9[%c32, %c0_9] : memref<128x1xf32, #tpu.memory_space<vmem>>, vector<16x1xf32>
    %12 = vector.broadcast %11 : vector<16x1xf32> to vector<16x8xf32>
    %13 = arith.addf %10, %12 : vector<16x8xf32>
    %cst_10 = arith.constant 0.000000e+00 : f32
    %14 = vector.broadcast %cst_10 : f32 to vector<16x8xf32>
    %15 = arith.maximumf %13, %14 : vector<16x8xf32>
    %c0_11 = arith.constant 0 : index
    %c0_12 = arith.constant 0 : index
    %16 = vector.load %arg5[%c0_11, %c0_12] : memref<16x16xbf16, #tpu.memory_space<vmem>>, vector<16x16xbf16>
    %17 = arith.truncf %15 : vector<16x8xf32> to vector<16x8xbf16>
    %cst_13 = arith.constant dense<0.000000e+00> : vector<16x8xf32>
    %18 = tpu.matmul %16, %17, %cst_13 {dimension_numbers = #tpu.dot_dimension_numbers<[1], [0], [0], [1], [0, 0, 1, 1], [], []>} : vector<16x16xbf16>, vector<16x8xbf16>, vector<16x8xf32> -> vector<16x8xf32>
    %c48 = arith.constant 48 : index
    %c0_14 = arith.constant 0 : index
    %19 = vector.load %arg9[%c48, %c0_14] : memref<128x1xf32, #tpu.memory_space<vmem>>, vector<16x1xf32>
    %20 = vector.broadcast %19 : vector<16x1xf32> to vector<16x8xf32>
    %21 = arith.addf %18, %20 : vector<16x8xf32>
    %22 = vector.extract_strided_slice %21 {offsets = [0, 0], sizes = [8, 8], strides = [1, 1]} : vector<16x8xf32> to vector<8x8xf32>
    %23 = vector.extract_strided_slice %21 {offsets = [8, 0], sizes = [8, 8], strides = [1, 1]} : vector<16x8xf32> to vector<8x8xf32>
    %c0_15 = arith.constant 0 : index
    %c0_16 = arith.constant 0 : index
    %24 = vector.load %arg2[%c0_15, %c0_16] : memref<8x8xf32, #tpu.memory_space<vmem>>, vector<8x8xf32>
    %cst_17 = arith.constant 5.000000e-01 : f32
    %25 = vector.broadcast %cst_17 : f32 to vector<8x8xf32>
    %26 = arith.mulf %25, %23 : vector<8x8xf32>
    %27 = math.exp %26 : vector<8x8xf32>
    %28 = arith.mulf %24, %27 : vector<8x8xf32>
    %29 = arith.addf %22, %28 : vector<8x8xf32>
    %c0_18 = arith.constant 0 : index
    %c0_19 = arith.constant 0 : index
    %30 = vector.load %arg6[%c0_18, %c0_19] : memref<16x8xbf16, #tpu.memory_space<vmem>>, vector<16x8xbf16>
    %31 = arith.truncf %29 : vector<8x8xf32> to vector<8x8xbf16>
    %cst_20 = arith.constant dense<0.000000e+00> : vector<16x8xf32>
    %32 = tpu.matmul %30, %31, %cst_20 {dimension_numbers = #tpu.dot_dimension_numbers<[1], [0], [0], [1], [0, 0, 1, 1], [], []>} : vector<16x8xbf16>, vector<8x8xbf16>, vector<16x8xf32> -> vector<16x8xf32>
    %c64 = arith.constant 64 : index
    %c0_21 = arith.constant 0 : index
    %33 = vector.load %arg9[%c64, %c0_21] : memref<128x1xf32, #tpu.memory_space<vmem>>, vector<16x1xf32>
    %34 = vector.broadcast %33 : vector<16x1xf32> to vector<16x8xf32>
    %35 = arith.addf %32, %34 : vector<16x8xf32>
    %cst_22 = arith.constant 0.000000e+00 : f32
    %36 = vector.broadcast %cst_22 : f32 to vector<16x8xf32>
    %37 = arith.maximumf %35, %36 : vector<16x8xf32>
    %c0_23 = arith.constant 0 : index
    %c0_24 = arith.constant 0 : index
    %38 = vector.load %arg7[%c0_23, %c0_24] : memref<32x16xbf16, #tpu.memory_space<vmem>>, vector<32x16xbf16>
    %39 = arith.truncf %37 : vector<16x8xf32> to vector<16x8xbf16>
    %cst_25 = arith.constant dense<0.000000e+00> : vector<32x8xf32>
    %40 = tpu.matmul %38, %39, %cst_25 {dimension_numbers = #tpu.dot_dimension_numbers<[1], [0], [0], [1], [0, 0, 1, 1], [], []>} : vector<32x16xbf16>, vector<16x8xbf16>, vector<32x8xf32> -> vector<32x8xf32>
    %c80 = arith.constant 80 : index
    %c0_26 = arith.constant 0 : index
    %41 = vector.load %arg9[%c80, %c0_26] : memref<128x1xf32, #tpu.memory_space<vmem>>, vector<32x1xf32>
    %42 = vector.broadcast %41 : vector<32x1xf32> to vector<32x8xf32>
    %43 = arith.addf %40, %42 : vector<32x8xf32>
    %cst_27 = arith.constant 0.000000e+00 : f32
    %44 = vector.broadcast %cst_27 : f32 to vector<32x8xf32>
    %45 = arith.maximumf %43, %44 : vector<32x8xf32>
    %c0_28 = arith.constant 0 : index
    %c0_29 = arith.constant 0 : index
    %46 = vector.load %arg8[%c0_28, %c0_29] : memref<16x32xbf16, #tpu.memory_space<vmem>>, vector<16x32xbf16>
    %47 = arith.truncf %45 : vector<32x8xf32> to vector<32x8xbf16>
    %cst_30 = arith.constant dense<0.000000e+00> : vector<16x8xf32>
    %48 = tpu.matmul %46, %47, %cst_30 {dimension_numbers = #tpu.dot_dimension_numbers<[1], [0], [0], [1], [0, 0, 1, 1], [], []>} : vector<16x32xbf16>, vector<32x8xbf16>, vector<16x8xf32> -> vector<16x8xf32>
    %c112 = arith.constant 112 : index
    %c0_31 = arith.constant 0 : index
    %49 = vector.load %arg9[%c112, %c0_31] : memref<128x1xf32, #tpu.memory_space<vmem>>, vector<16x1xf32>
    %50 = vector.broadcast %49 : vector<16x1xf32> to vector<16x8xf32>
    %51 = arith.addf %48, %50 : vector<16x8xf32>
    %c0_32 = arith.constant 0 : index
    %c0_33 = arith.constant 0 : index
    %52 = vector.load %arg10[%c0_32, %c0_33] : memref<32x8xf32, #tpu.memory_space<vmem>>, vector<16x8xf32>
    tpu.vector_store %arg10[%c0_32, %c0_33], %51 {strides = array<i32>} : memref<32x8xf32, #tpu.memory_space<vmem>>, vector<16x8xf32>,
    %c16 = arith.constant 16 : index
    %c0_34 = arith.constant 0 : index
    %53 = vector.load %arg10[%c16, %c0_34] : memref<32x8xf32, #tpu.memory_space<vmem>>, vector<16x8xf32>
    tpu.vector_store %arg10[%c16, %c0_34], %21 {strides = array<i32>} : memref<32x8xf32, #tpu.memory_space<vmem>>, vector<16x8xf32>,
    return
  }
  func.func @transform_0(%arg0: i32) -> (i32, i32) {
    %c0_i32 = arith.constant 0 : i32
    %c0_i32_0 = arith.constant 0 : i32
    return %c0_i32, %arg0 : i32, i32
  }
  func.func @transform_1(%arg0: i32) -> (i32, i32) {
    %c0_i32 = arith.constant 0 : i32
    %c0_i32_0 = arith.constant 0 : i32
    return %c0_i32, %arg0 : i32, i32
  }
  func.func @transform_2(%arg0: i32) -> (i32, i32) {
    %c0_i32 = arith.constant 0 : i32
    %c0_i32_0 = arith.constant 0 : i32
    %c0_i32_1 = arith.constant 0 : i32
    return %c0_i32, %c0_i32_0 : i32, i32
  }
  func.func @transform_3(%arg0: i32) -> (i32, i32) {
    %c0_i32 = arith.constant 0 : i32
    %c0_i32_0 = arith.constant 0 : i32
    %c0_i32_1 = arith.constant 0 : i32
    return %c0_i32, %c0_i32_0 : i32, i32
  }
  func.func @transform_4(%arg0: i32) -> (i32, i32) {
    %c0_i32 = arith.constant 0 : i32
    %c0_i32_0 = arith.constant 0 : i32
    %c0_i32_1 = arith.constant 0 : i32
    return %c0_i32, %c0_i32_0 : i32, i32
  }
  func.func @transform_5(%arg0: i32) -> (i32, i32) {
    %c0_i32 = arith.constant 0 : i32
    %c0_i32_0 = arith.constant 0 : i32
    %c0_i32_1 = arith.constant 0 : i32
    return %c0_i32, %c0_i32_0 : i32, i32
  }
  func.func @transform_6(%arg0: i32) -> (i32, i32) {
    %c0_i32 = arith.constant 0 : i32
    %c0_i32_0 = arith.constant 0 : i32
    %c0_i32_1 = arith.constant 0 : i32
    return %c0_i32, %c0_i32_0 : i32, i32
  }
  func.func @transform_7(%arg0: i32) -> (i32, i32) {
    %c0_i32 = arith.constant 0 : i32
    %c0_i32_0 = arith.constant 0 : i32
    %c0_i32_1 = arith.constant 0 : i32
    return %c0_i32, %c0_i32_0 : i32, i32
  }
  func.func @transform_8(%arg0: i32) -> (i32, i32) {
    %c0_i32 = arith.constant 0 : i32
    %c0_i32_0 = arith.constant 0 : i32
    %c0_i32_1 = arith.constant 0 : i32
    return %c0_i32, %c0_i32_0 : i32, i32
  }
  func.func @transform_9(%arg0: i32) -> (i32, i32) {
    %c0_i32 = arith.constant 0 : i32
    %c0_i32_0 = arith.constant 0 : i32
    return %c0_i32, %arg0 : i32, i32
  }
}

</mosaic_0001>

<llo_original>
// kernel: tpu_custom_call.1
$region0: #{tpu_custom_call.1}
  #allocation0 [shape = 'u32[]', space=smem, size = 0x4, offset = 0x4, fixed_abs, tag = 'smem constant byte address 0x4 - core index']
  #allocation1 [shape = 'u32[144,128]{1,0:T(1,128)}', space=vmem, size = 0x12000, scoped, tag = 'internal scratch']
  %s0 = inlined_call_operand.vmem [shape: bf16[16,8], index: 0, kind: input, shape index: {}]
  %s1 = inlined_call_operand.vmem [shape: f32[8,8], index: 1, kind: input, shape index: {}]
  %s2 = inlined_call_operand.vmem [shape: bf16[32,16], index: 2, kind: input, shape index: {}]
  %s3 = inlined_call_operand.vmem [shape: bf16[16,32], index: 3, kind: input, shape index: {}]
  %s4 = inlined_call_operand.vmem [shape: bf16[16,16], index: 4, kind: input, shape index: {}]
  %s5 = inlined_call_operand.vmem [shape: bf16[16,8], index: 5, kind: input, shape index: {}]
  %s6 = inlined_call_operand.vmem [shape: bf16[32,16], index: 6, kind: input, shape index: {}]
  %s7 = inlined_call_operand.vmem [shape: bf16[16,32], index: 7, kind: input, shape index: {}]
  %s8 = inlined_call_operand.vmem [shape: f32[128,1], index: 8, kind: input, shape index: {}]
  %s9 = inlined_call_operand.vmem [shape: f32[32,8], index: 9, kind: output, shape index: {}]
  %s10 = sld [smem:[#allocation0]]
  $region46: #{tpu_custom_call.1} parent=0
    _
  %s12 = ssub.s32 1, %s10
  %s13 = scalar_select 0, %s12, %s10
  // Predicated region
  $region2: #{tpu_custom_call.1} parent=0 // pred_check
    _
  $region3: #{tpu_custom_call.1} parent=0 // pred_check_branch
    %15 = sbr.rel (0) target = $region5
  $region4: #{tpu_custom_call.1} parent=0 // pred_region
    _
  $region5: #{tpu_custom_call.1} parent=0 // pred_fallthru
    _
  // Predicated region
  $region6: #{tpu_custom_call.1} parent=0 // pred_check
    _
  $region7: #{tpu_custom_call.1} parent=0 // pred_check_branch
    %17 = sbr.rel (0) target = $region9
  $region8: #{tpu_custom_call.1} parent=0 // pred_region
    _
  $region9: #{tpu_custom_call.1} parent=0 // pred_fallthru
    _
  // Predicated region
  $region10: #{tpu_custom_call.1} parent=0 // pred_check
    _
  $region11: #{tpu_custom_call.1} parent=0 // pred_check_branch
    %19 = sbr.rel (0) target = $region13
  $region12: #{tpu_custom_call.1} parent=0 // pred_region
    _
  $region13: #{tpu_custom_call.1} parent=0 // pred_fallthru
    _
  // Predicated region
  $region14: #{tpu_custom_call.1} parent=0 // pred_check
    _
  $region15: #{tpu_custom_call.1} parent=0 // pred_check_branch
    %21 = sbr.rel (0) target = $region17
  $region16: #{tpu_custom_call.1} parent=0 // pred_region
    _
  $region17: #{tpu_custom_call.1} parent=0 // pred_fallthru
    _
  // Predicated region
  $region18: #{tpu_custom_call.1} parent=0 // pred_check
    _
  $region19: #{tpu_custom_call.1} parent=0 // pred_check_branch
    %23 = sbr.rel (0) target = $region21
  $region20: #{tpu_custom_call.1} parent=0 // pred_region
    _
  $region21: #{tpu_custom_call.1} parent=0 // pred_fallthru
    _
  // Predicated region
  $region22: #{tpu_custom_call.1} parent=0 // pred_check
    _
  $region23: #{tpu_custom_call.1} parent=0 // pred_check_branch
    %25 = sbr.rel (0) target = $region25
  $region24: #{tpu_custom_call.1} parent=0 // pred_region
    _
  $region25: #{tpu_custom_call.1} parent=0 // pred_fallthru
    _
  // Predicated region
  $region26: #{tpu_custom_call.1} parent=0 // pred_check
    _
  $region27: #{tpu_custom_call.1} parent=0 // pred_check_branch
    %27 = sbr.rel (0) target = $region29
  $region28: #{tpu_custom_call.1} parent=0 // pred_region
    _
  $region29: #{tpu_custom_call.1} parent=0 // pred_fallthru
    _
  // Predicated region
  $region30: #{tpu_custom_call.1} parent=0 // pred_check
    _
  $region31: #{tpu_custom_call.1} parent=0 // pred_check_branch
    %29 = sbr.rel (0) target = $region33
  $region32: #{tpu_custom_call.1} parent=0 // pred_region
    _
  $region33: #{tpu_custom_call.1} parent=0 // pred_fallthru
    _
  // Predicated region
  $region34: #{tpu_custom_call.1} parent=0 // pred_check
    _
  $region35: #{tpu_custom_call.1} parent=0 // pred_check_branch
    %31 = sbr.rel (0) target = $region37
  $region36: #{tpu_custom_call.1} parent=0 // pred_region
    _
  $region37: #{tpu_custom_call.1} parent=0 // pred_fallthru
    _
  %v33 = vld [vmem:[%s0] sm:$0xf]
  %v34 = vld [vmem:[%s0 + $0x4] sm:$0xf]
  %v35 = vld [vmem:[%s2] sm:$0xf]
  %v36 = vld [vmem:[%s2 + $0x4] sm:$0xf]
  %v37 = vld [vmem:[%s2 + $0x8] sm:$0xf]
  %v38 = vld [vmem:[%s2 + $0xc] sm:$0xf]
  %v39 = vld [vmem:[%s8] sm:$0xff]
  %v40 = vld [vmem:[%s8 + $0x8] sm:$0xff]
  %v41 = vld [vmem:[%s8 + $0x10] sm:$0xff]
  %v42 = vld [vmem:[%s8 + $0x18] sm:$0xff]
  %44 = vset.pattern.permute.xlu0 0
  %45 = vperm.xlu0 %44, %v39
  %v46 = vpop.permute.xlu0 %45
  %49 = vset.pattern.permute.xlu0 0
  %50 = vperm.xlu0 %49, %v40
  %v51 = vpop.permute.xlu0 %50
  %54 = vset.pattern.permute.xlu0 0
  %55 = vperm.xlu0 %54, %v41
  %v56 = vpop.permute.xlu0 %55
  %59 = vset.pattern.permute.xlu0 0
  %60 = vperm.xlu0 %59, %v42
  %v61 = vpop.permute.xlu0 %60
  %v67 = vunpack.c.l.b16 %v35
  %v68 = vunpack.c.l.b16 %v36
  %v69 = vunpack.c.l.b16 %v37
  %v70 = vunpack.c.l.b16 %v38
  %v71 = vpack.c.b16 %v68, %v67
  %v72 = vpack.c.b16 %v70, %v69
  %v75 = vunpack.c.l.b16 %v33
  %v76 = vunpack.c.l.b16 %v34
  %v77 = vpack.c.b16 %v76, %v75
  %vm79 = vcmask 130048
  %v81 = vsel %vm79, %v71, 0
  %v84 = vsel %vm79, %v72, 0
  %86 = vmatprep.subr.bf16.mxu0 0
  %87 = vmatpush1.bf16.msra.mxu0 %v77
  %88 = vmatprep.subr.bf16.mxu0 0
  %89 = vmatpush1.bf16.msra.mxu0 0
  %90 = vmatprep.subr.bf16.mxu0 0
  %91 = vmatpush1.bf16.msra.mxu0 0
  %92 = vmatprep.subr.bf16.mxu0 0
  %93 = vmatpush1.bf16.msra.mxu0 0
  %94 = vmatprep.subr.bf16.mxu0 0
  %95 = vmatpush1.bf16.msra.mxu0 0
  %96 = vmatprep.subr.bf16.mxu0 0
  %97 = vmatpush1.bf16.msra.mxu0 0
  %98 = vmatprep.subr.bf16.mxu0 0
  %99 = vmatpush1.bf16.msra.mxu0 0
  %100 = vmatprep.subr.bf16.mxu0 0
  %101 = vmatpush1.bf16.msra.mxu0 0
  %102 = vmatprep.subr.bf16.mxu0 0
  %103 = vmatpush1.bf16.msra.mxu0 0
  %104 = vmatprep.subr.bf16.mxu0 0
  %105 = vmatpush1.bf16.msra.mxu0 0
  %106 = vmatprep.subr.bf16.mxu0 0
  %107 = vmatpush1.bf16.msra.mxu0 0
  %108 = vmatprep.subr.bf16.mxu0 0
  %109 = vmatpush1.bf16.msra.mxu0 0
  %110 = vmatprep.subr.bf16.mxu0 0
  %111 = vmatpush1.bf16.msra.mxu0 0
  %112 = vmatprep.subr.bf16.mxu0 0
  %113 = vmatpush1.bf16.msra.mxu0 0
  %114 = vmatprep.subr.bf16.mxu0 0
  %115 = vmatpush1.bf16.msra.mxu0 0
  %116 = vmatprep.subr.bf16.mxu0 0
  %117 = vmatpush1.bf16.msra.mxu0 0
  %118 = vmatprep.mubr.bf16.mxu0 0
  %119 = vmatmul.mubr.bf16.gmra.mrb[0].mxu0 %v81
  %v120 = vpop.f32.mrb[0].mxu0
  %v121 = vadd.f32 %v46, %v120
  %v122 = vpop.f32.mrb[0].mxu0
  %v123 = vpop.f32.mrb[0].mxu0
  %v124 = vadd.f32 %v51, %v123
  %v125 = vpop.f32.mrb[0].mxu0
  %126 = vmatprep.mubr.bf16.mxu0 0
  %127 = vmatmul.mubr.bf16.gmra.mrb[0].mxu0 %v84
  %v128 = vpop.f32.mrb[0].mxu0
  %v129 = vadd.f32 %v56, %v128
  %v130 = vpop.f32.mrb[0].mxu0
  %v131 = vpop.f32.mrb[0].mxu0
  %v132 = vadd.f32 %v61, %v131
  %v133 = vpop.f32.mrb[0].mxu0
  %134 = vdwg.mxu0
  %v135 = vmax.f32 %v121, 0.0
  %v136 = vmax.f32 %v124, 0.0
  %v137 = vmax.f32 %v129, 0.0
  %v138 = vmax.f32 %v132, 0.0
  %v139 = vld [vmem:[%s3] sm:$0xf]
  %v140 = vld [vmem:[%s3 + $0x4] sm:$0xf]
  %v141 = vpack.c.bf16 %v136, %v135
  %v142 = vpack.c.bf16 %v138, %v137
  %v143 = vld [vmem:[%s8 + $0x20] sm:$0xff]
  %v144 = vld [vmem:[%s8 + $0x28] sm:$0xff]
  %146 = vset.pattern.permute.xlu0 0
  %147 = vperm.xlu0 %146, %v143
  %v148 = vpop.permute.xlu0 %147
  %151 = vset.pattern.permute.xlu0 0
  %152 = vperm.xlu0 %151, %v144
  %v153 = vpop.permute.xlu0 %152
  %v157 = vunpack.c.l.b16 %v139
  %v158 = vunpack.c.l.b16 %v140
  %v159 = vpack.c.b16 %v158, %v157
  %vm160 = vcmask 261120
  %v162 = vsel %vm160, %v159, 0
  %164 = vmatprep.subr.bf16.mxu0 0
  %165 = vmatpush1.bf16.msra.mxu0 %v141
  %166 = vmatprep.subr.bf16.mxu0 0
  %167 = vmatpush1.bf16.msra.mxu0 %v142
  %168 = vmatprep.subr.bf16.mxu0 0
  %169 = vmatpush1.bf16.msra.mxu0 0
  %170 = vmatprep.subr.bf16.mxu0 0
  %171 = vmatpush1.bf16.msra.mxu0 0
  %172 = vmatprep.subr.bf16.mxu0 0
  %173 = vmatpush1.bf16.msra.mxu0 0
  %174 = vmatprep.subr.bf16.mxu0 0
  %175 = vmatpush1.bf16.msra.mxu0 0
  %176 = vmatprep.subr.bf16.mxu0 0
  %177 = vmatpush1.bf16.msra.mxu0 0
  %178 = vmatprep.subr.bf16.mxu0 0
  %179 = vmatpush1.bf16.msra.mxu0 0
  %180 = vmatprep.subr.bf16.mxu0 0
  %181 = vmatpush1.bf16.msra.mxu0 0
  %182 = vmatprep.subr.bf16.mxu0 0
  %183 = vmatpush1.bf16.msra.mxu0 0
  %184 = vmatprep.subr.bf16.mxu0 0
  %185 = vmatpush1.bf16.msra.mxu0 0
  %186 = vmatprep.subr.bf16.mxu0 0
  %187 = vmatpush1.bf16.msra.mxu0 0
  %188 = vmatprep.subr.bf16.mxu0 0
  %189 = vmatpush1.bf16.msra.mxu0 0
  %190 = vmatprep.subr.bf16.mxu0 0
  %191 = vmatpush1.bf16.msra.mxu0 0
  %192 = vmatprep.subr.bf16.mxu0 0
  %193 = vmatpush1.bf16.msra.mxu0 0
  %194 = vmatprep.subr.bf16.mxu0 0
  %195 = vmatpush1.bf16.msra.mxu0 0
  %196 = vmatprep.mubr.bf16.mxu0 0
  %197 = vmatmul.mubr.bf16.gmra.mrb[0].mxu0 %v162
  %v198 = vpop.f32.mrb[0].mxu0
  %v199 = vadd.f32 %v148, %v198
  %v200 = vpop.f32.mrb[0].mxu0
  %v201 = vpop.f32.mrb[0].mxu0
  %v202 = vadd.f32 %v153, %v201
  %v203 = vpop.f32.mrb[0].mxu0
  %204 = vdwg.mxu0
  %v205 = vmax.f32 %v199, 0.0
  %v206 = vmax.f32 %v202, 0.0
  %v207 = vld [vmem:[%s4] sm:$0xf]
  %v208 = vld [vmem:[%s4 + $0x4] sm:$0xf]
  %v209 = vpack.c.bf16 %v206, %v205
  %v210 = vld [vmem:[%s8 + $0x30] sm:$0xff]
  %v211 = vld [vmem:[%s8 + $0x38] sm:$0xff]
  %213 = vset.pattern.permute.xlu0 0
  %214 = vperm.xlu0 %213, %v210
  %v215 = vpop.permute.xlu0 %214
  %218 = vset.pattern.permute.xlu0 0
  %219 = vperm.xlu0 %218, %v211
  %v220 = vpop.permute.xlu0 %219
  %v224 = vunpack.c.l.b16 %v207
  %v225 = vunpack.c.l.b16 %v208
  %v226 = vpack.c.b16 %v225, %v224
  %v228 = vsel %vm79, %v226, 0
  %230 = vmatprep.subr.bf16.mxu0 0
  %231 = vmatpush1.bf16.msra.mxu0 %v209
  %232 = vmatprep.subr.bf16.mxu0 0
  %233 = vmatpush1.bf16.msra.mxu0 0
  %234 = vmatprep.subr.bf16.mxu0 0
  %235 = vmatpush1.bf16.msra.mxu0 0
  %236 = vmatprep.subr.bf16.mxu0 0
  %237 = vmatpush1.bf16.msra.mxu0 0
  %238 = vmatprep.subr.bf16.mxu0 0
  %239 = vmatpush1.bf16.msra.mxu0 0
  %240 = vmatprep.subr.bf16.mxu0 0
  %241 = vmatpush1.bf16.msra.mxu0 0
  %242 = vmatprep.subr.bf16.mxu0 0
  %243 = vmatpush1.bf16.msra.mxu0 0
  %244 = vmatprep.subr.bf16.mxu0 0
  %245 = vmatpush1.bf16.msra.mxu0 0
  %246 = vmatprep.subr.bf16.mxu0 0
  %247 = vmatpush1.bf16.msra.mxu0 0
  %248 = vmatprep.subr.bf16.mxu0 0
  %249 = vmatpush1.bf16.msra.mxu0 0
  %250 = vmatprep.subr.bf16.mxu0 0
  %251 = vmatpush1.bf16.msra.mxu0 0
  %252 = vmatprep.subr.bf16.mxu0 0
  %253 = vmatpush1.bf16.msra.mxu0 0
  %254 = vmatprep.subr.bf16.mxu0 0
  %255 = vmatpush1.bf16.msra.mxu0 0
  %256 = vmatprep.subr.bf16.mxu0 0
  %257 = vmatpush1.bf16.msra.mxu0 0
  %258 = vmatprep.subr.bf16.mxu0 0
  %259 = vmatpush1.bf16.msra.mxu0 0
  %260 = vmatprep.subr.bf16.mxu0 0
  %261 = vmatpush1.bf16.msra.mxu0 0
  %262 = vmatprep.mubr.bf16.mxu0 0
  %263 = vmatmul.mubr.bf16.gmra.mrb[0].mxu0 %v228
  %v264 = vpop.f32.mrb[0].mxu0
  %v265 = vadd.f32 %v215, %v264
  %v266 = vpop.f32.mrb[0].mxu0
  %v267 = vpop.f32.mrb[0].mxu0
  %v268 = vadd.f32 %v220, %v267
  %v269 = vpop.f32.mrb[0].mxu0
  %270 = vdwg.mxu0
  %v271 = vld [vmem:[%s1] sm:$0xff]
  %v272 = vmul.f32 %v268, 0.5
  %v273 = vmul.f32 %v272, 1.442695
  %v274 = vpow.pop %v273
  %v275 = vmul.f32 %v271, %v274
  %v276 = vadd.f32 %v265, %v275
  %v277 = vld [vmem:[%s5] sm:$0xf]
  %v278 = vld [vmem:[%s5 + $0x4] sm:$0xf]
  %v279 = vpack.c.bf16 %v276, %v276
  %v280 = vld [vmem:[%s8 + $0x40] sm:$0xff]
  %v281 = vld [vmem:[%s8 + $0x48] sm:$0xff]
  %283 = vset.pattern.permute.xlu0 0
  %284 = vperm.xlu0 %283, %v280
  %v285 = vpop.permute.xlu0 %284
  %288 = vset.pattern.permute.xlu0 0
  %289 = vperm.xlu0 %288, %v281
  %v290 = vpop.permute.xlu0 %289
  %v294 = vunpack.c.l.b16 %v277
  %v295 = vunpack.c.l.b16 %v278
  %v296 = vpack.c.b16 %v295, %v294
  %vm297 = vcmask 64512
  %v299 = vsel %vm297, %v296, 0
  %vm301 = vcmask 1043456
  %v303 = vsel %vm301, %v279, 0
  %305 = vmatprep.subr.bf16.mxu0 0
  %306 = vmatpush1.bf16.msra.mxu0 %v303
  %307 = vmatprep.subr.bf16.mxu0 0
  %308 = vmatpush1.bf16.msra.mxu0 0
  %309 = vmatprep.subr.bf16.mxu0 0
  %310 = vmatpush1.bf16.msra.mxu0 0
  %311 = vmatprep.subr.bf16.mxu0 0
  %312 = vmatpush1.bf16.msra.mxu0 0
  %313 = vmatprep.subr.bf16.mxu0 0
  %314 = vmatpush1.bf16.msra.mxu0 0
  %315 = vmatprep.subr.bf16.mxu0 0
  %316 = vmatpush1.bf16.msra.mxu0 0
  %317 = vmatprep.subr.bf16.mxu0 0
  %318 = vmatpush1.bf16.msra.mxu0 0
  %319 = vmatprep.subr.bf16.mxu0 0
  %320 = vmatpush1.bf16.msra.mxu0 0
  %321 = vmatprep.subr.bf16.mxu0 0
  %322 = vmatpush1.bf16.msra.mxu0 0
  %323 = vmatprep.subr.bf16.mxu0 0
  %324 = vmatpush1.bf16.msra.mxu0 0
  %325 = vmatprep.subr.bf16.mxu0 0
  %326 = vmatpush1.bf16.msra.mxu0 0
  %327 = vmatprep.subr.bf16.mxu0 0
  %328 = vmatpush1.bf16.msra.mxu0 0
  %329 = vmatprep.subr.bf16.mxu0 0
  %330 = vmatpush1.bf16.msra.mxu0 0
  %331 = vmatprep.subr.bf16.mxu0 0
  %332 = vmatpush1.bf16.msra.mxu0 0
  %333 = vmatprep.subr.bf16.mxu0 0
  %334 = vmatpush1.bf16.msra.mxu0 0
  %335 = vmatprep.subr.bf16.mxu0 0
  %336 = vmatpush1.bf16.msra.mxu0 0
  %337 = vmatprep.mubr.bf16.mxu0 0
  %338 = vmatmul.mubr.bf16.gmra.mrb[0].mxu0 %v299
  %v339 = vpop.f32.mrb[0].mxu0
  %v340 = vadd.f32 %v285, %v339
  %v341 = vpop.f32.mrb[0].mxu0
  %v342 = vpop.f32.mrb[0].mxu0
  %v343 = vadd.f32 %v290, %v342
  %v344 = vpop.f32.mrb[0].mxu0
  %345 = vdwg.mxu0
  %v346 = vmax.f32 %v340, 0.0
  %v347 = vmax.f32 %v343, 0.0
  %v348 = vld [vmem:[%s6] sm:$0xf]
  %v349 = vld [vmem:[%s6 + $0x4] sm:$0xf]
  %v350 = vld [vmem:[%s6 + $0x8] sm:$0xf]
  %v351 = vld [vmem:[%s6 + $0xc] sm:$0xf]
  %v352 = vpack.c.bf16 %v347, %v346
  %v353 = vld [vmem:[%s8 + $0x50] sm:$0xff]
  %v354 = vld [vmem:[%s8 + $0x58] sm:$0xff]
  %v355 = vld [vmem:[%s8 + $0x60] sm:$0xff]
  %v356 = vld [vmem:[%s8 + $0x68] sm:$0xff]
  %358 = vset.pattern.permute.xlu0 0
  %359 = vperm.xlu0 %358, %v353
  %v360 = vpop.permute.xlu0 %359
  %363 = vset.pattern.permute.xlu0 0
  %364 = vperm.xlu0 %363, %v354
  %v365 = vpop.permute.xlu0 %364
  %368 = vset.pattern.permute.xlu0 0
  %369 = vperm.xlu0 %368, %v355
  %v370 = vpop.permute.xlu0 %369
  %373 = vset.pattern.permute.xlu0 0
  %374 = vperm.xlu0 %373, %v356
  %v375 = vpop.permute.xlu0 %374
  %v381 = vunpack.c.l.b16 %v348
  %v382 = vunpack.c.l.b16 %v349
  %v383 = vunpack.c.l.b16 %v350
  %v384 = vunpack.c.l.b16 %v351
  %v385 = vpack.c.b16 %v382, %v381
  %v386 = vpack.c.b16 %v384, %v383
  %v388 = vsel %vm79, %v385, 0
  %v391 = vsel %vm79, %v386, 0
  %393 = vmatprep.subr.bf16.mxu0 0
  %394 = vmatpush1.bf16.msra.mxu0 %v352
  %395 = vmatprep.subr.bf16.mxu0 0
  %396 = vmatpush1.bf16.msra.mxu0 0
  %397 = vmatprep.subr.bf16.mxu0 0
  %398 = vmatpush1.bf16.msra.mxu0 0
  %399 = vmatprep.subr.bf16.mxu0 0
  %400 = vmatpush1.bf16.msra.mxu0 0
  %401 = vmatprep.subr.bf16.mxu0 0
  %402 = vmatpush1.bf16.msra.mxu0 0
  %403 = vmatprep.subr.bf16.mxu0 0
  %404 = vmatpush1.bf16.msra.mxu0 0
  %405 = vmatprep.subr.bf16.mxu0 0
  %406 = vmatpush1.bf16.msra.mxu0 0
  %407 = vmatprep.subr.bf16.mxu0 0
  %408 = vmatpush1.bf16.msra.mxu0 0
  %409 = vmatprep.subr.bf16.mxu0 0
  %410 = vmatpush1.bf16.msra.mxu0 0
  %411 = vmatprep.subr.bf16.mxu0 0
  %412 = vmatpush1.bf16.msra.mxu0 0
  %413 = vmatprep.subr.bf16.mxu0 0
  %414 = vmatpush1.bf16.msra.mxu0 0
  %415 = vmatprep.subr.bf16.mxu0 0
  %416 = vmatpush1.bf16.msra.mxu0 0
  %417 = vmatprep.subr.bf16.mxu0 0
  %418 = vmatpush1.bf16.msra.mxu0 0
  %419 = vmatprep.subr.bf16.mxu0 0
  %420 = vmatpush1.bf16.msra.mxu0 0
  %421 = vmatprep.subr.bf16.mxu0 0
  %422 = vmatpush1.bf16.msra.mxu0 0
  %423 = vmatprep.subr.bf16.mxu0 0
  %424 = vmatpush1.bf16.msra.mxu0 0
  %425 = vmatprep.mubr.bf16.mxu0 0
  %426 = vmatmul.mubr.bf16.gmra.mrb[0].mxu0 %v388
  %v427 = vpop.f32.mrb[0].mxu0
  %v428 = vadd.f32 %v360, %v427
  %v429 = vpop.f32.mrb[0].mxu0
  %v430 = vpop.f32.mrb[0].mxu0
  %v431 = vadd.f32 %v365, %v430
  %v432 = vpop.f32.mrb[0].mxu0
  %433 = vmatprep.mubr.bf16.mxu0 0
  %434 = vmatmul.mubr.bf16.gmra.mrb[0].mxu0 %v391
  %v435 = vpop.f32.mrb[0].mxu0
  %v436 = vadd.f32 %v370, %v435
  %v437 = vpop.f32.mrb[0].mxu0
  %v438 = vpop.f32.mrb[0].mxu0
  %v439 = vadd.f32 %v375, %v438
  %v440 = vpop.f32.mrb[0].mxu0
  %441 = vdwg.mxu0
  %v442 = vmax.f32 %v428, 0.0
  %v443 = vmax.f32 %v431, 0.0
  %v444 = vmax.f32 %v436, 0.0
  %v445 = vmax.f32 %v439, 0.0
  %v446 = vld [vmem:[%s7] sm:$0xf]
  %v447 = vld [vmem:[%s7 + $0x4] sm:$0xf]
  %v448 = vpack.c.bf16 %v443, %v442
  %v449 = vpack.c.bf16 %v445, %v444
  %v450 = vld [vmem:[%s8 + $0x70] sm:$0xff]
  %v451 = vld [vmem:[%s8 + $0x78] sm:$0xff]
  %453 = vset.pattern.permute.xlu0 0
  %454 = vperm.xlu0 %453, %v450
  %v455 = vpop.permute.xlu0 %454
  %458 = vset.pattern.permute.xlu0 0
  %459 = vperm.xlu0 %458, %v451
  %v460 = vpop.permute.xlu0 %459
  %v464 = vunpack.c.l.b16 %v446
  %v465 = vunpack.c.l.b16 %v447
  %v466 = vpack.c.b16 %v465, %v464
  %v468 = vsel %vm160, %v466, 0
  %470 = vmatprep.subr.bf16.mxu0 0
  %471 = vmatpush1.bf16.msra.mxu0 %v448
  %472 = vmatprep.subr.bf16.mxu0 0
  %473 = vmatpush1.bf16.msra.mxu0 %v449
  %474 = vmatprep.subr.bf16.mxu0 0
  %475 = vmatpush1.bf16.msra.mxu0 0
  %476 = vmatprep.subr.bf16.mxu0 0
  %477 = vmatpush1.bf16.msra.mxu0 0
  %478 = vmatprep.subr.bf16.mxu0 0
  %479 = vmatpush1.bf16.msra.mxu0 0
  %480 = vmatprep.subr.bf16.mxu0 0
  %481 = vmatpush1.bf16.msra.mxu0 0
  %482 = vmatprep.subr.bf16.mxu0 0
  %483 = vmatpush1.bf16.msra.mxu0 0
  %484 = vmatprep.subr.bf16.mxu0 0
  %485 = vmatpush1.bf16.msra.mxu0 0
  %486 = vmatprep.subr.bf16.mxu0 0
  %487 = vmatpush1.bf16.msra.mxu0 0
  %488 = vmatprep.subr.bf16.mxu0 0
  %489 = vmatpush1.bf16.msra.mxu0 0
  %490 = vmatprep.subr.bf16.mxu0 0
  %491 = vmatpush1.bf16.msra.mxu0 0
  %492 = vmatprep.subr.bf16.mxu0 0
  %493 = vmatpush1.bf16.msra.mxu0 0
  %494 = vmatprep.subr.bf16.mxu0 0
  %495 = vmatpush1.bf16.msra.mxu0 0
  %496 = vmatprep.subr.bf16.mxu0 0
  %497 = vmatpush1.bf16.msra.mxu0 0
  %498 = vmatprep.subr.bf16.mxu0 0
  %499 = vmatpush1.bf16.msra.mxu0 0
  %500 = vmatprep.subr.bf16.mxu0 0
  %501 = vmatpush1.bf16.msra.mxu0 0
  %502 = vmatprep.mubr.bf16.mxu0 0
  %503 = vmatmul.mubr.bf16.gmra.mrb[0].mxu0 %v468
  %v504 = vpop.f32.mrb[0].mxu0
  %v505 = vadd.f32 %v455, %v504
  %v506 = vpop.f32.mrb[0].mxu0
  %v507 = vpop.f32.mrb[0].mxu0
  %v508 = vadd.f32 %v460, %v507
  %v509 = vpop.f32.mrb[0].mxu0
  %510 = vdwg.mxu0
  %511 = vst.msk [vmem:[%s9] sm:$0xff] %vm297, %v505
  %512 = vst.msk [vmem:[%s9 + $0x8] sm:$0xff] %vm297, %v508
  %513 = vst.msk [vmem:[%s9 + $0x10] sm:$0xff] %vm297, %v265
  %514 = vst.msk [vmem:[%s9 + $0x18] sm:$0xff] %vm297, %v268
  // Predicated region
  $region38: #{tpu_custom_call.1} parent=0 // pred_check
    _
  $region39: #{tpu_custom_call.1} parent=0 // pred_check_branch
    %516 = sbr.rel (0) target = $region41
  $region40: #{tpu_custom_call.1} parent=0 // pred_region
    _
  $region41: #{tpu_custom_call.1} parent=0 // pred_fallthru
    _
  // Predicated region
  $region42: #{tpu_custom_call.1} parent=0 // pred_check
    _
  $region43: #{tpu_custom_call.1} parent=0 // pred_check_branch
    %518 = sbr.rel (0) target = $region45
  $region44: #{tpu_custom_call.1} parent=0 // pred_region
    _
  $region45: #{tpu_custom_call.1} parent=0 // pred_fallthru
    _

</llo_original>
